<compile_context>
chip_gen: v7x
topology: tpu7x:2x2x1
jax: 0.10.0
libtpu: 0.0.40
codegen_flags: <defaults>
</compile_context>

<pallas_src>
import functools
import math

import jax
import jax.numpy as jnp
from jax.experimental import pallas as pl
from jax.experimental.pallas import tpu as pltpu


def _round_up(x, m):
    return ((x + m - 1) // m) * m


def _mlp_kernel(t_ref, h_ref, small_ref, *refs, num_hidden_layers, mlp_size, out_size):
    """refs = (w0_h, w1, ..., w_{L-1}, w_final, out_ref).

    small_ref packs the tiny (1, N) parameters row-wise (f32):
      row 0        : w0_t  (time column of the first weight), width mlp_size
      rows 1 .. L  : hidden-layer biases b0 .. b_{L-1},       width mlp_size
      row  L + 1   : final-layer bias,                        width out_size
    The 0.909 LipSwish scale is pre-folded into every weight matrix after the
    first, so the in-kernel activation is plain silu: x * sigmoid(x).
    """
    out_ref = refs[-1]
    w_refs = refs[:-1]

    t = t_ref[0, 0]

    # First hidden layer: h @ W0_h + (t * W0_t + b0), then silu.
    w0_h = w_refs[0][...]
    w0_t = small_ref[0:1, :mlp_size]
    b0 = small_ref[1:2, :mlp_size]
    x = jnp.dot(h_ref[...], w0_h, preferred_element_type=jnp.float32)
    x = x + (t * w0_t + b0)
    x = x * jax.nn.sigmoid(x)          # sigmoid -> EUP slot; 0.909 folded into weights

    # Remaining hidden layers: Linear + silu (f32 elementwise, narrow MXU feed).
    for layer in range(1, num_hidden_layers):
        w = w_refs[layer][...]
        b = small_ref[layer + 1:layer + 2, :mlp_size]
        x = jnp.dot(x.astype(w.dtype), w, preferred_element_type=jnp.float32) + b
        x = x * jax.nn.sigmoid(x)

    # Final layer + tanh.  Output kept at its true column width: one dense
    # vreg store per row plus a short masked tail; no padded HBM columns.
    w = w_refs[num_hidden_layers][...]
    b = small_ref[num_hidden_layers + 1:num_hidden_layers + 2, :out_size]
    x = jnp.dot(x.astype(w.dtype), w, preferred_element_type=jnp.float32) + b
    out_ref[...] = jnp.tanh(x).astype(out_ref.dtype)


def init_discriminator_params(key, data_size, hidden_size, mlp_size, num_layers):
    """Deterministic PyTorch-style Linear init (U(-1/sqrt(fan_in), +1/sqrt(fan_in))).

    Returns a list of (W, b) with W stored as (in_features, out_features).
    """
    in_size = 1 + hidden_size
    out_size = hidden_size * (1 + data_size)

    dims = [in_size] + [mlp_size] * num_layers + [out_size]
    params = []
    for i in range(len(dims) - 1):
        fan_in, fan_out = dims[i], dims[i + 1]
        k = 1.0 / math.sqrt(fan_in)
        key, kw, kb = jax.random.split(key, 3)
        w = jax.random.uniform(kw, (fan_in, fan_out), jnp.float32, -k, k)
        b = jax.random.uniform(kb, (fan_out,), jnp.float32, -k, k)
        params.append((w, b))
    return params


def _choose_batch_tiling(batch, row_tile):
    """Pick (block_b, padded_batch) for the batch grid axis.

    Keeps batch padding to at most a few sublane rows, caps the tile at
    row_tile, and guarantees >= 2 grid steps when batch allows so the
    "parallel" axis can be sharded across v7x's two TensorCores.
    """
    n_tiles = max(1, -(-batch // row_tile))        # ceil(batch / row_tile)
    if n_tiles < 2 and batch >= 16:
        n_tiles = 2
    block_b = _round_up(-(-batch // n_tiles), 8)   # ceil, rounded to sublane
    padded_batch = n_tiles * block_b
    return block_b, padded_batch


def discriminator_func_forward(t, h, params, data_size, hidden_size, *,
                               row_tile=512,
                               param_dtype=jnp.float32,
                               out_dtype=jnp.float32):
    """Pallas-backed DiscriminatorFunc.forward(t, h)."""
    batch, hdim = h.shape
    assert hdim == hidden_size
    out_size = hidden_size * (1 + data_size)
    mlp_size = params[0][0].shape[1]
    num_hidden_layers = len(params) - 1            # linear layers followed by LipSwish

    # --- parameter prep (one-time layout work; no per-row broadcast/concat) ---
    w0, _ = params[0]
    w0_t = w0[:1, :]                               # (1, mlp): weight row for t
    w0_h = w0[1:, :].astype(param_dtype)           # (hidden, mlp)

    # Fold the 0.909 LipSwish scale into every weight matrix after the first.
    weights = [w0_h]
    for w, _ in params[1:]:
        weights.append((0.909 * w).astype(param_dtype))

    # Pack w0_t and all biases into one stacked f32 array (single DMA/buffer).
    max_w = max(mlp_size, out_size)
    small_rows = [jnp.pad(w0_t, ((0, 0), (0, max_w - mlp_size)))]
    for _, b in params[:-1]:
        small_rows.append(jnp.pad(b.reshape(1, -1), ((0, 0), (0, max_w - mlp_size))))
    small_rows.append(jnp.pad(params[-1][1].reshape(1, -1),
                              ((0, 0), (0, max_w - out_size))))
    small = jnp.concatenate(small_rows, axis=0).astype(jnp.float32)

    # --- batch tiling ---
    block_b, padded_batch = _choose_batch_tiling(batch, row_tile)
    h_p = h.astype(param_dtype)
    if padded_batch != batch:
        h_p = jnp.pad(h_p, ((0, padded_batch - batch), (0, 0)))
    grid = (padded_batch // block_b,)

    t_arr = jnp.reshape(t, (1, 1)).astype(jnp.float32)   # SMEM scalar

    in_specs = [
        pl.BlockSpec(memory_space=pltpu.MemorySpace.SMEM),           # t
        pl.BlockSpec((block_b, hidden_size), lambda i: (i, 0)),      # h tile
        pl.BlockSpec(small.shape, lambda i: (0, 0)),                 # packed small params
    ]
    # Weight matrices: full blocks, resident across all grid steps (constant
    # index_map -> fetched once).
    # TODO(synk): add pipeline_mode=pl.Buffered(1) / stream the mlp dim for
    # large mlp_size on v7x (halves resident-weight VMEM).
    for w in weights:
        in_specs.append(pl.BlockSpec(w.shape, lambda i: (0, 0)))

    # Output at its true column width (full-extent last dim): no column padding
    # in HBM and no wrapper-side slice/copy pass over the output.
    out_spec = pl.BlockSpec((block_b, out_size), lambda i: (i, 0))

    flops = 2 * padded_batch * (
        hidden_size * mlp_size
        + (num_hidden_layers - 1) * mlp_size * mlp_size
        + mlp_size * out_size
    )
    transcendentals = padded_batch * (num_hidden_layers * mlp_size + out_size)
    bytes_accessed = (
        padded_batch * hidden_size * h_p.dtype.itemsize
        + padded_batch * out_size * jnp.dtype(out_dtype).itemsize
        + sum(int(w.size) * w.dtype.itemsize for w in weights)
        + int(small.size) * 4
        + 4
    )

    kernel = functools.partial(
        _mlp_kernel,
        num_hidden_layers=num_hidden_layers,
        mlp_size=mlp_size,
        out_size=out_size,
    )

    out_flat = pl.pallas_call(
        kernel,
        out_shape=jax.ShapeDtypeStruct((padded_batch, out_size), out_dtype),
        grid=grid,
        in_specs=in_specs,
        out_specs=out_spec,
        compiler_params=pltpu.CompilerParams(
            dimension_semantics=("parallel",),      # v7x: shard batch across 2 TCs
        ),
        cost_estimate=pl.CostEstimate(
            flops=int(flops),
            transcendentals=int(transcendentals),
            bytes_accessed=int(bytes_accessed),
        ),
    )(t_arr, h_p, small, *weights)

    if padded_batch != batch:
        out_flat = out_flat[:batch]
    # glue: .view(batch, hidden_size, 1 + data_size)
    return out_flat.reshape(batch, hidden_size, 1 + data_size)


def _reference_forward(t, h, params, data_size, hidden_size):
    """Pure-JAX reference mirroring the PyTorch module (f32 throughout)."""
    batch = h.shape[0]
    t_col = jnp.broadcast_to(jnp.reshape(t, (1, 1)).astype(h.dtype), (batch, 1))
    x = jnp.concatenate([t_col, h], axis=1)
    for w, b in params[:-1]:
        x = x @ w + b
        x = 0.909 * x * jax.nn.sigmoid(x)
    w, b = params[-1]
    x = jnp.tanh(x @ w + b)
    return x.reshape(batch, hidden_size, 1 + data_size)


if __name__ == "__main__":
    # small shapes consistent with DiscriminatorFunc(data_size, hidden_size, mlp_size, num_layers)
    data_size = 4
    hidden_size = 32
    mlp_size = 32
    num_layers = 2

    key = jax.random.PRNGKey(0)
    k_param, k_h, k_t = jax.random.split(key, 3)

    params = init_discriminator_params(k_param, data_size, hidden_size, mlp_size, num_layers)
    t = jax.random.uniform(k_t, (), jnp.float32)   # scalar time

    # 1) f32 path, batch=8 (single grid step) — exact check vs pure-JAX reference.
    h8 = jax.random.normal(k_h, (8, hidden_size), jnp.float32)
    out8 = jax.block_until_ready(
        discriminator_func_forward(t, h8, params, data_size, hidden_size))
    assert out8.shape == (8, hidden_size, 1 + data_size), out8.shape
    ref8 = _reference_forward(t, h8, params, data_size, hidden_size)
    assert jnp.allclose(out8, ref8, atol=1e-5, rtol=1e-5), "f32 mismatch (batch=8)"

    # 2) ragged batch exercising the multi-step grid + minimal batch padding.
    h40 = jax.random.normal(jax.random.PRNGKey(1), (40, hidden_size), jnp.float32)
    out40 = jax.block_until_ready(
        discriminator_func_forward(t, h40, params, data_size, hidden_size))
    assert out40.shape == (40, hidden_size, 1 + data_size), out40.shape
    ref40 = _reference_forward(t, h40, params, data_size, hidden_size)
    assert jnp.allclose(out40, ref40, atol=1e-5, rtol=1e-5), "f32 mismatch (batch=40)"

    # 3) bf16 weight/activation storage (v6e/v7x fast path); looser tolerance.
    out_bf16 = jax.block_until_ready(
        discriminator_func_forward(t, h40, params, data_size, hidden_size,
                                   param_dtype=jnp.bfloat16))
    assert jnp.allclose(out_bf16, ref40, atol=5e-2, rtol=5e-2), "bf16 mismatch (batch=40)"

    print("KERNEL_OK")
</pallas_src>

<mosaic_0001>
module attributes {stable_mosaic.version = 11 : i64} {
  func.func @_mlp_kernel(%arg0: i32, %arg1: memref<1x1xf32, #tpu.memory_space<smem>>, %arg2: memref<8x32xf32, #tpu.memory_space<vmem>>, %arg3: memref<4x160xf32, #tpu.memory_space<vmem>>, %arg4: memref<32x32xf32, #tpu.memory_space<vmem>>, %arg5: memref<32x32xf32, #tpu.memory_space<vmem>>, %arg6: memref<32x160xf32, #tpu.memory_space<vmem>>, %arg7: memref<8x160xf32, #tpu.memory_space<vmem>>) attributes {dimension_semantics = [#tpu.dimension_semantics<parallel>], iteration_bounds = array<i64: 1>, scalar_prefetch = 0 : i64, scratch_operands = 0 : i64, tpu.core_type = #tpu.core_type<tc>, window_params = [{transform_indices = @transform_0, window_bounds = array<i64: 1, 1>}, {transform_indices = @transform_1, window_bounds = array<i64: 8, 32>}, {pipeline_mode = #tpu.pipeline_mode<synchronous>, transform_indices = @transform_2, window_bounds = array<i64: 4, 160>}, {pipeline_mode = #tpu.pipeline_mode<synchronous>, transform_indices = @transform_3, window_bounds = array<i64: 32, 32>}, {pipeline_mode = #tpu.pipeline_mode<synchronous>, transform_indices = @transform_4, window_bounds = array<i64: 32, 32>}, {pipeline_mode = #tpu.pipeline_mode<synchronous>, transform_indices = @transform_5, window_bounds = array<i64: 32, 160>}, {transform_indices = @transform_6, window_bounds = array<i64: 8, 160>}]} {
    %c0 = arith.constant 0 : index
    %c0_0 = arith.constant 0 : index
    %0 = memref.load %arg1[%c0, %c0_0] : memref<1x1xf32, #tpu.memory_space<smem>>
    %c0_1 = arith.constant 0 : index
    %c0_2 = arith.constant 0 : index
    %1 = vector.load %arg4[%c0_1, %c0_2] : memref<32x32xf32, #tpu.memory_space<vmem>>, vector<32x32xf32>
    %c0_3 = arith.constant 0 : index
    %c0_4 = arith.constant 0 : index
    %2 = vector.load %arg3[%c0_3, %c0_4] : memref<4x160xf32, #tpu.memory_space<vmem>>, vector<1x32xf32>
    %c1 = arith.constant 1 : index
    %c0_5 = arith.constant 0 : index
    %3 = vector.load %arg3[%c1, %c0_5] : memref<4x160xf32, #tpu.memory_space<vmem>>, vector<1x32xf32>
    %c0_6 = arith.constant 0 : index
    %c0_7 = arith.constant 0 : index
    %4 = vector.load %arg2[%c0_6, %c0_7] : memref<8x32xf32, #tpu.memory_space<vmem>>, vector<8x32xf32>
    %cst = arith.constant dense<0.000000e+00> : vector<8x32xf32>
    %5 = tpu.matmul %4, %1, %cst {dimension_numbers = #tpu.dot_dimension_numbers<[1], [0], [0], [1], [0, 0, 1, 1], [], []>} : vector<8x32xf32>, vector<32x32xf32>, vector<8x32xf32> -> vector<8x32xf32>
    %6 = vector.broadcast %0 : f32 to vector<1x32xf32>
    %7 = arith.mulf %6, %2 : vector<1x32xf32>
    %8 = arith.addf %7, %3 : vector<1x32xf32>
    %9 = vector.broadcast %8 : vector<1x32xf32> to vector<8x32xf32>
    %10 = arith.addf %5, %9 : vector<8x32xf32>
    %11 = arith.negf %10 : vector<8x32xf32>
    %12 = math.exp %11 : vector<8x32xf32>
    %cst_8 = arith.constant 1.000000e+00 : f32
    %13 = vector.broadcast %cst_8 : f32 to vector<8x32xf32>
    %14 = arith.addf %13, %12 : vector<8x32xf32>
    %15 = arith.divf %13, %14 : vector<8x32xf32>
    %16 = arith.mulf %10, %15 : vector<8x32xf32>
    %c0_9 = arith.constant 0 : index
    %c0_10 = arith.constant 0 : index
    %17 = vector.load %arg5[%c0_9, %c0_10] : memref<32x32xf32, #tpu.memory_space<vmem>>, vector<32x32xf32>
    %c2 = arith.constant 2 : index
    %c0_11 = arith.constant 0 : index
    %18 = vector.load %arg3[%c2, %c0_11] : memref<4x160xf32, #tpu.memory_space<vmem>>, vector<1x32xf32>
    %cst_12 = arith.constant dense<0.000000e+00> : vector<8x32xf32>
    %19 = tpu.matmul %16, %17, %cst_12 {dimension_numbers = #tpu.dot_dimension_numbers<[1], [0], [0], [1], [0, 0, 1, 1], [], []>} : vector<8x32xf32>, vector<32x32xf32>, vector<8x32xf32> -> vector<8x32xf32>
    %20 = vector.broadcast %18 : vector<1x32xf32> to vector<8x32xf32>
    %21 = arith.addf %19, %20 : vector<8x32xf32>
    %22 = arith.negf %21 : vector<8x32xf32>
    %23 = math.exp %22 : vector<8x32xf32>
    %cst_13 = arith.constant 1.000000e+00 : f32
    %24 = vector.broadcast %cst_13 : f32 to vector<8x32xf32>
    %25 = arith.addf %24, %23 : vector<8x32xf32>
    %26 = arith.divf %24, %25 : vector<8x32xf32>
    %27 = arith.mulf %21, %26 : vector<8x32xf32>
    %c0_14 = arith.constant 0 : index
    %c0_15 = arith.constant 0 : index
    %28 = vector.load %arg6[%c0_14, %c0_15] : memref<32x160xf32, #tpu.memory_space<vmem>>, vector<32x160xf32>
    %c3 = arith.constant 3 : index
    %c0_16 = arith.constant 0 : index
    %29 = vector.load %arg3[%c3, %c0_16] : memref<4x160xf32, #tpu.memory_space<vmem>>, vector<1x160xf32>
    %cst_17 = arith.constant dense<0.000000e+00> : vector<8x160xf32>
    %30 = tpu.matmul %27, %28, %cst_17 {dimension_numbers = #tpu.dot_dimension_numbers<[1], [0], [0], [1], [0, 0, 1, 1], [], []>} : vector<8x32xf32>, vector<32x160xf32>, vector<8x160xf32> -> vector<8x160xf32>
    %31 = vector.broadcast %29 : vector<1x160xf32> to vector<8x160xf32>
    %32 = arith.addf %30, %31 : vector<8x160xf32>
    %33 = math.tanh %32 : vector<8x160xf32>
    %c0_18 = arith.constant 0 : index
    %c0_19 = arith.constant 0 : index
    %34 = vector.load %arg7[%c0_18, %c0_19] : memref<8x160xf32, #tpu.memory_space<vmem>>, vector<8x160xf32>
    tpu.vector_store %arg7[%c0_18, %c0_19], %33 {strides = array<i32>} : memref<8x160xf32, #tpu.memory_space<vmem>>, vector<8x160xf32>,
    return
  }
  func.func @transform_0(%arg0: i32) -> (i32, i32) {
    %c0_i32 = arith.constant 0 : i32
    %c0_i32_0 = arith.constant 0 : i32
    %c0_i32_1 = arith.constant 0 : i32
    return %c0_i32, %c0_i32_0 : i32, i32
  }
  func.func @transform_1(%arg0: i32) -> (i32, i32) {
    %c0_i32 = arith.constant 0 : i32
    %c0_i32_0 = arith.constant 0 : i32
    return %arg0, %c0_i32 : i32, i32
  }
  func.func @transform_2(%arg0: i32) -> (i32, i32) {
    %c0_i32 = arith.constant 0 : i32
    %c0_i32_0 = arith.constant 0 : i32
    %c0_i32_1 = arith.constant 0 : i32
    return %c0_i32, %c0_i32_0 : i32, i32
  }
  func.func @transform_3(%arg0: i32) -> (i32, i32) {
    %c0_i32 = arith.constant 0 : i32
    %c0_i32_0 = arith.constant 0 : i32
    %c0_i32_1 = arith.constant 0 : i32
    return %c0_i32, %c0_i32_0 : i32, i32
  }
  func.func @transform_4(%arg0: i32) -> (i32, i32) {
    %c0_i32 = arith.constant 0 : i32
    %c0_i32_0 = arith.constant 0 : i32
    %c0_i32_1 = arith.constant 0 : i32
    return %c0_i32, %c0_i32_0 : i32, i32
  }
  func.func @transform_5(%arg0: i32) -> (i32, i32) {
    %c0_i32 = arith.constant 0 : i32
    %c0_i32_0 = arith.constant 0 : i32
    %c0_i32_1 = arith.constant 0 : i32
    return %c0_i32, %c0_i32_0 : i32, i32
  }
  func.func @transform_6(%arg0: i32) -> (i32, i32) {
    %c0_i32 = arith.constant 0 : i32
    %c0_i32_0 = arith.constant 0 : i32
    return %arg0, %c0_i32 : i32, i32
  }
}

</mosaic_0001>

<llo_original>
// kernel: tpu_custom_call.1
$region0: #{tpu_custom_call.1}
  #allocation0 [shape = 'u32[]', space=smem, size = 0x4, offset = 0x4, fixed_abs, tag = 'smem constant byte address 0x4 - core index']
  #allocation1 [shape = 'u32[144,128]{1,0:T(1,128)}', space=vmem, size = 0x12000, scoped, tag = 'internal scratch']
  #allocation2 [shape = 'f32[1,1]{1,0:T(1,128)S(6)}', space=smem, size = 0x200, scoped, tag = 'scoped memory for tpu_custom_call.1']
  %s0 = inlined_call_operand.<no memory space> [shape: f32[1,1], index: 0, kind: input, shape index: {}]
  %s1 = inlined_call_operand.hbm [shape: f32[8,32], index: 1, kind: input, shape index: {}]
  %s2 = inlined_call_operand.hbm [shape: f32[4,160], index: 2, kind: input, shape index: {}]
  %s3 = inlined_call_operand.hbm [shape: f32[32,32], index: 3, kind: input, shape index: {}]
  %s4 = inlined_call_operand.hbm [shape: f32[32,32], index: 4, kind: input, shape index: {}]
  %s5 = inlined_call_operand.hbm [shape: f32[32,160], index: 5, kind: input, shape index: {}]
  %s6 = inlined_call_operand.hbm [shape: f32[8,160], index: 6, kind: output, shape index: {}]
  %s7 = sld [smem:[#allocation0]]
  $region54: #{tpu_custom_call.1} parent=0
    _
  %s9 = ssub.s32 1, %s7
  %s10 = scalar_select 0, %s9, %s7
  %11 = sst [smem:[#allocation2]] %s0
  $region1: #{tpu_custom_call.1} parent=0
    #allocation3 [shape = 'u8[4096]{0}', space=vmem, size = 0x1000, scoped, tag = 'input window, operand 1, single buffered']
    #allocation4 [shape = 's32[1]{0}', space=sflag, size = 0x4, scoped, tag = 'scoped memory for tpu_custom_call.1']
    #allocation5 [shape = 's32[1]{0}', space=sflag, size = 0x4, scoped, tag = 'scoped memory for tpu_custom_call.1']
    #allocation6 [shape = 'u8[4096]{0}', space=vmem, size = 0x1000, scoped, tag = 'input window, operand 2, single buffered']
    #allocation7 [shape = 's32[1]{0}', space=sflag, size = 0x4, scoped, tag = 'scoped memory for tpu_custom_call.1']
    #allocation8 [shape = 'u8[16384]{0}', space=vmem, size = 0x4000, scoped, tag = 'input window, operand 3, single buffered']
    #allocation9 [shape = 'u8[16384]{0}', space=vmem, size = 0x4000, scoped, tag = 'input window, operand 4, single buffered']
    #allocation10 [shape = 's32[1]{0}', space=sflag, size = 0x4, scoped, tag = 'scoped memory for tpu_custom_call.1']
    #allocation11 [shape = 'u8[32768]{0}', space=vmem, size = 0x8000, scoped, tag = 'input window, operand 5, single buffered']
    #allocation12 [shape = 'u8[8192]{0}', space=vmem, size = 0x2000, scoped, tag = 'output window, operand 0, single buffered']
    %12 = vsyncpa [#allocation4], 0
    %13 = vsyncpa [#allocation7], 0
    %14 = vsyncpa [#allocation10], 0
    %15 = vsyncpa [#allocation5], 0
    // Predicated region
    $region2: #{tpu_custom_call.1} parent=1 // pred_check
      _
    $region3: #{tpu_custom_call.1} parent=1 // pred_check_branch
      %17 = sbr.rel (0) target = $region5
    $region4: #{tpu_custom_call.1} parent=1 // pred_region
      _
    $region5: #{tpu_custom_call.1} parent=1 // pred_fallthru
      _
    // Predicated region
    $region6: #{tpu_custom_call.1} parent=1 // pred_check
      _
    $region7: #{tpu_custom_call.1} parent=1 // pred_check_branch
      %19 = sbr.rel (0) target = $region9
    $region8: #{tpu_custom_call.1} parent=1 // pred_region
      %s21 = ssub.s32 128, 128
      %22 = vsyncadd [#allocation4], %s21
      %s24 = sshll.u32 [#allocation3], 4
      %s25 = int_to_ptr.vmem [resolvable:$true] %s24
      %27 = dma.hbm_to_vmem [thread:$0]  %s1, 128, %s25, [#allocation4]
    $region9: #{tpu_custom_call.1} parent=1 // pred_fallthru
      _
    // Predicated region
    $region10: #{tpu_custom_call.1} parent=1 // pred_check
      _
    $region11: #{tpu_custom_call.1} parent=1 // pred_check_branch
      %29 = sbr.rel (0) target = $region13
    $region12: #{tpu_custom_call.1} parent=1 // pred_region
      %s31 = ssub.s32 128, 128
      %32 = vsyncadd [#allocation7], %s31
      %s34 = sshll.u32 [#allocation6], 4
      %s35 = int_to_ptr.vmem [resolvable:$true] %s34
      %37 = dma.hbm_to_vmem [thread:$0]  %s2, 128, %s35, [#allocation7]
    $region13: #{tpu_custom_call.1} parent=1 // pred_fallthru
      _
    // Predicated region
    $region14: #{tpu_custom_call.1} parent=1 // pred_check
      _
    $region15: #{tpu_custom_call.1} parent=1 // pred_check_branch
      %39 = sbr.rel (0) target = $region17
    $region16: #{tpu_custom_call.1} parent=1 // pred_region
      %s41 = ssub.s32 512, 512
      %42 = vsyncadd [#allocation7], %s41
      %s43 = sshll.u32 [#allocation8], 4
      %s44 = int_to_ptr.vmem [resolvable:$true] %s43
      %49 = dma.hbm_to_vmem [thread:$0]  %s3, 512, %s44, [#allocation7], 128, 128, 8
    $region17: #{tpu_custom_call.1} parent=1 // pred_fallthru
      _
    // Predicated region
    $region18: #{tpu_custom_call.1} parent=1 // pred_check
      _
    $region19: #{tpu_custom_call.1} parent=1 // pred_check_branch
      %51 = sbr.rel (0) target = $region21
    $region20: #{tpu_custom_call.1} parent=1 // pred_region
      %s53 = ssub.s32 512, 512
      %54 = vsyncadd [#allocation10], %s53
      %s55 = sshll.u32 [#allocation9], 4
      %s56 = int_to_ptr.vmem [resolvable:$true] %s55
      %61 = dma.hbm_to_vmem [thread:$0]  %s4, 512, %s56, [#allocation10], 128, 128, 8
    $region21: #{tpu_custom_call.1} parent=1 // pred_fallthru
      _
    // Predicated region
    $region22: #{tpu_custom_call.1} parent=1 // pred_check
      _
    $region23: #{tpu_custom_call.1} parent=1 // pred_check_branch
      %63 = sbr.rel (0) target = $region25
    $region24: #{tpu_custom_call.1} parent=1 // pred_region
      %s65 = ssub.s32 1024, 1024
      %66 = vsyncadd [#allocation10], %s65
      %s67 = sshll.u32 [#allocation11], 4
      %s68 = int_to_ptr.vmem [resolvable:$true] %s67
      %73 = dma.hbm_to_vmem [thread:$0]  %s5, 1024, %s68, [#allocation10], 256, 256, 16
    $region25: #{tpu_custom_call.1} parent=1 // pred_fallthru
      _
    // Predicated region
    $region26: #{tpu_custom_call.1} parent=1 // pred_check
      _
    $region27: #{tpu_custom_call.1} parent=1 // pred_check_branch
      %75 = sbr.rel (0) target = $region29
    $region28: #{tpu_custom_call.1} parent=1 // pred_region
      %76 = dma.done [#allocation4], 128
    $region29: #{tpu_custom_call.1} parent=1 // pred_fallthru
      _
    // Predicated region
    $region30: #{tpu_custom_call.1} parent=1 // pred_check
      _
    $region31: #{tpu_custom_call.1} parent=1 // pred_check_branch
      %78 = sbr.rel (0) target = $region33
    $region32: #{tpu_custom_call.1} parent=1 // pred_region
      %79 = dma.done [#allocation7], 128
    $region33: #{tpu_custom_call.1} parent=1 // pred_fallthru
      _
    // Predicated region
    $region34: #{tpu_custom_call.1} parent=1 // pred_check
      _
    $region35: #{tpu_custom_call.1} parent=1 // pred_check_branch
      %81 = sbr.rel (0) target = $region37
    $region36: #{tpu_custom_call.1} parent=1 // pred_region
      %82 = dma.done [#allocation7], 512
    $region37: #{tpu_custom_call.1} parent=1 // pred_fallthru
      _
    // Predicated region
    $region38: #{tpu_custom_call.1} parent=1 // pred_check
      _
    $region39: #{tpu_custom_call.1} parent=1 // pred_check_branch
      %84 = sbr.rel (0) target = $region41
    $region40: #{tpu_custom_call.1} parent=1 // pred_region
      %85 = dma.done [#allocation10], 512
    $region41: #{tpu_custom_call.1} parent=1 // pred_fallthru
      _
    // Predicated region
    $region42: #{tpu_custom_call.1} parent=1 // pred_check
      _
    $region43: #{tpu_custom_call.1} parent=1 // pred_check_branch
      %87 = sbr.rel (0) target = $region45
    $region44: #{tpu_custom_call.1} parent=1 // pred_region
      %88 = dma.done [#allocation10], 1024
    $region45: #{tpu_custom_call.1} parent=1 // pred_fallthru
      _
    %s89 = sld [smem:[#allocation2]]
    %v90 = vld [vmem:[#allocation8] sm:$0xff]
    %v91 = vld [vmem:[#allocation8 + $0x8] sm:$0xff]
    %v92 = vld [vmem:[#allocation8 + $0x10] sm:$0xff]
    %v93 = vld [vmem:[#allocation8 + $0x18] sm:$0xff]
    %v94 = vld [vmem:[#allocation6] sm:$0x1]
    %v95 = vld [vmem:[#allocation6 + $0x1] sm:$0x1]
    %v96 = vld [vmem:[#allocation3] sm:$0xff]
    %v97 = vstv %s89
    %v98 = vmul.f32 %v97, %v94
    %v99 = vadd.f32 %v98, %v95
    %v100 = vlaneseq
    %v101 = vshrl.u32 %v100, 7
    %v102 = vsub.s32 0, %v101
    %v103 = vrot.slane %v99, %v102
    %vm104 = vcmask 261120
    %v106 = vsel %vm104, %v96, 0
    %108 = vmatprep.subr.mxu0 0.0
    %109 = vmatpush1.msra.mxu0 %v90
    %110 = vmatprep.subr.mxu0 0.0
    %111 = vmatpush1.msra.mxu0 %v91
    %112 = vmatprep.subr.mxu0 0.0
    %113 = vmatpush1.msra.mxu0 %v92
    %114 = vmatprep.subr.mxu0 0.0
    %115 = vmatpush1.msra.mxu0 %v93
    %116 = vmatprep.subr.mxu0 0.0
    %117 = vmatpush1.msra.mxu0 0.0
    %118 = vmatprep.subr.mxu0 0.0
    %119 = vmatpush1.msra.mxu0 0.0
    %120 = vmatprep.subr.mxu0 0.0
    %121 = vmatpush1.msra.mxu0 0.0
    %122 = vmatprep.subr.mxu0 0.0
    %123 = vmatpush1.msra.mxu0 0.0
    %124 = vmatprep.subr.mxu0 0.0
    %125 = vmatpush1.msra.mxu0 0.0
    %126 = vmatprep.subr.mxu0 0.0
    %127 = vmatpush1.msra.mxu0 0.0
    %128 = vmatprep.subr.mxu0 0.0
    %129 = vmatpush1.msra.mxu0 0.0
    %130 = vmatprep.subr.mxu0 0.0
    %131 = vmatpush1.msra.mxu0 0.0
    %132 = vmatprep.subr.mxu0 0.0
    %133 = vmatpush1.msra.mxu0 0.0
    %134 = vmatprep.subr.mxu0 0.0
    %135 = vmatpush1.msra.mxu0 0.0
    %136 = vmatprep.subr.mxu0 0.0
    %137 = vmatpush1.msra.mxu0 0.0
    %138 = vmatprep.subr.mxu0 0.0
    %139 = vmatpush1.msra.mxu0 0.0
    %140 = vmatprep.subr.mxu0 0.0
    %141 = vmatpush1.msra.mxu0 0.0
    %142 = vmatprep.subr.mxu0 0.0
    %143 = vmatpush1.msra.mxu0 0.0
    %144 = vmatprep.subr.mxu0 0.0
    %145 = vmatpush1.msra.mxu0 0.0
    %146 = vmatprep.subr.mxu0 0.0
    %147 = vmatpush1.msra.mxu0 0.0
    %148 = vmatprep.subr.mxu0 0.0
    %149 = vmatpush1.msra.mxu0 0.0
    %150 = vmatprep.subr.mxu0 0.0
    %151 = vmatpush1.msra.mxu0 0.0
    %152 = vmatprep.subr.mxu0 0.0
    %153 = vmatpush1.msra.mxu0 0.0
    %154 = vmatprep.subr.mxu0 0.0
    %155 = vmatpush1.msra.mxu0 0.0
    %156 = vmatprep.subr.mxu0 0.0
    %157 = vmatpush1.msra.mxu0 0.0
    %158 = vmatprep.subr.mxu0 0.0
    %159 = vmatpush1.msra.mxu0 0.0
    %160 = vmatprep.subr.mxu0 0.0
    %161 = vmatpush1.msra.mxu0 0.0
    %162 = vmatprep.subr.mxu0 0.0
    %163 = vmatpush1.msra.mxu0 0.0
    %164 = vmatprep.subr.mxu0 0.0
    %165 = vmatpush1.msra.mxu0 0.0
    %166 = vmatprep.subr.mxu0 0.0
    %167 = vmatpush1.msra.mxu0 0.0
    %168 = vmatprep.subr.mxu0 0.0
    %169 = vmatpush1.msra.mxu0 0.0
    %170 = vmatprep.subr.mxu0 0.0
    %171 = vmatpush1.msra.mxu0 0.0
    %172 = vmatprep.mubr.f32.mxu0 0.0
    %173 = vmatmul.mubr.f32.gmra.mrb[0].mxu0 %v106
    %v174 = vpop.f32.mrb[0].mxu0
    %v175 = vadd.f32 %v103, %v174
    %v176 = vpop.f32.mrb[0].mxu0
    %177 = vdwg.mxu0
    %v178 = vxor.u32 %v175, 2147483648
    %v179 = vmul.f32 %v178, 1.442695
    %v180 = vpow.pop %v179
    %v181 = vadd.f32 %v180, 1.0
    %v182 = vrcp.pop %v181
    %v183 = vmul.f32 1.0, %v182
    %v184 = vmul.f32 %v175, %v183
    %v185 = vld [vmem:[#allocation9] sm:$0xff]
    %v186 = vld [vmem:[#allocation9 + $0x8] sm:$0xff]
    %v187 = vld [vmem:[#allocation9 + $0x10] sm:$0xff]
    %v188 = vld [vmem:[#allocation9 + $0x18] sm:$0xff]
    %v189 = vld [vmem:[#allocation6 + $0x2] sm:$0x1]
    %v190 = vlaneseq
    %v191 = vshrl.u32 %v190, 7
    %v192 = vsub.s32 0, %v191
    %v193 = vrot.slane %v189, %v192
    %v195 = vsel %vm104, %v184, 0
    %197 = vmatprep.subr.mxu0 0.0
    %198 = vmatpush1.msra.mxu0 %v185
    %199 = vmatprep.subr.mxu0 0.0
    %200 = vmatpush1.msra.mxu0 %v186
    %201 = vmatprep.subr.mxu0 0.0
    %202 = vmatpush1.msra.mxu0 %v187
    %203 = vmatprep.subr.mxu0 0.0
    %204 = vmatpush1.msra.mxu0 %v188
    %205 = vmatprep.subr.mxu0 0.0
    %206 = vmatpush1.msra.mxu0 0.0
    %207 = vmatprep.subr.mxu0 0.0
    %208 = vmatpush1.msra.mxu0 0.0
    %209 = vmatprep.subr.mxu0 0.0
    %210 = vmatpush1.msra.mxu0 0.0
    %211 = vmatprep.subr.mxu0 0.0
    %212 = vmatpush1.msra.mxu0 0.0
    %213 = vmatprep.subr.mxu0 0.0
    %214 = vmatpush1.msra.mxu0 0.0
    %215 = vmatprep.subr.mxu0 0.0
    %216 = vmatpush1.msra.mxu0 0.0
    %217 = vmatprep.subr.mxu0 0.0
    %218 = vmatpush1.msra.mxu0 0.0
    %219 = vmatprep.subr.mxu0 0.0
    %220 = vmatpush1.msra.mxu0 0.0
    %221 = vmatprep.subr.mxu0 0.0
    %222 = vmatpush1.msra.mxu0 0.0
    %223 = vmatprep.subr.mxu0 0.0
    %224 = vmatpush1.msra.mxu0 0.0
    %225 = vmatprep.subr.mxu0 0.0
    %226 = vmatpush1.msra.mxu0 0.0
    %227 = vmatprep.subr.mxu0 0.0
    %228 = vmatpush1.msra.mxu0 0.0
    %229 = vmatprep.subr.mxu0 0.0
    %230 = vmatpush1.msra.mxu0 0.0
    %231 = vmatprep.subr.mxu0 0.0
    %232 = vmatpush1.msra.mxu0 0.0
    %233 = vmatprep.subr.mxu0 0.0
    %234 = vmatpush1.msra.mxu0 0.0
    %235 = vmatprep.subr.mxu0 0.0
    %236 = vmatpush1.msra.mxu0 0.0
    %237 = vmatprep.subr.mxu0 0.0
    %238 = vmatpush1.msra.mxu0 0.0
    %239 = vmatprep.subr.mxu0 0.0
    %240 = vmatpush1.msra.mxu0 0.0
    %241 = vmatprep.subr.mxu0 0.0
    %242 = vmatpush1.msra.mxu0 0.0
    %243 = vmatprep.subr.mxu0 0.0
    %244 = vmatpush1.msra.mxu0 0.0
    %245 = vmatprep.subr.mxu0 0.0
    %246 = vmatpush1.msra.mxu0 0.0
    %247 = vmatprep.subr.mxu0 0.0
    %248 = vmatpush1.msra.mxu0 0.0
    %249 = vmatprep.subr.mxu0 0.0
    %250 = vmatpush1.msra.mxu0 0.0
    %251 = vmatprep.subr.mxu0 0.0
    %252 = vmatpush1.msra.mxu0 0.0
    %253 = vmatprep.subr.mxu0 0.0
    %254 = vmatpush1.msra.mxu0 0.0
    %255 = vmatprep.subr.mxu0 0.0
    %256 = vmatpush1.msra.mxu0 0.0
    %257 = vmatprep.subr.mxu0 0.0
    %258 = vmatpush1.msra.mxu0 0.0
    %259 = vmatprep.subr.mxu0 0.0
    %260 = vmatpush1.msra.mxu0 0.0
    %261 = vmatprep.mubr.f32.mxu0 0.0
    %262 = vmatmul.mubr.f32.gmra.mrb[0].mxu0 %v195
    %v263 = vpop.f32.mrb[0].mxu0
    %v264 = vadd.f32 %v193, %v263
    %v265 = vpop.f32.mrb[0].mxu0
    %266 = vdwg.mxu0
    %v267 = vxor.u32 %v264, 2147483648
    %v268 = vmul.f32 %v267, 1.442695
    %v269 = vpow.pop %v268
    %v270 = vadd.f32 %v269, 1.0
    %v271 = vrcp.pop %v270
    %v272 = vmul.f32 1.0, %v271
    %v273 = vmul.f32 %v264, %v272
    %v274 = vld [vmem:[#allocation11] sm:$0xff]
    %v275 = vld [vmem:[#allocation11 + $0x8] sm:$0xff]
    %v276 = vld [vmem:[#allocation11 + $0x10] sm:$0xff]
    %v277 = vld [vmem:[#allocation11 + $0x18] sm:$0xff]
    %v278 = vld [vmem:[#allocation11 + $0x20] sm:$0xff]
    %v279 = vld [vmem:[#allocation11 + $0x28] sm:$0xff]
    %v280 = vld [vmem:[#allocation11 + $0x30] sm:$0xff]
    %v281 = vld [vmem:[#allocation11 + $0x38] sm:$0xff]
    %s282 = scalar_lea.vmem [#allocation6], 3
    %v283 = vld [vmem:[%s282] ss:$4 sm:$0x3]
    %v285 = vlaneseq
    %v286 = vshrl.u32 %v285, 7
    %v287 = vsub.s32 0, %v286
    %v288 = vrot.slane %v283, %v287
    %v289 = vlaneseq
    %v290 = vshrl.u32 %v289, 7
    %v291 = vsub.s32 1, %v290
    %v292 = vrot.slane %v283, %v291
    %v296 = vsel %vm104, %v273, 0
    %298 = vmatprep.subr.mxu0 %v275
    %299 = vmatpush1.msra.mxu0 %v274
    %300 = vmatprep.subr.mxu0 %v277
    %301 = vmatpush1.msra.mxu0 %v276
    %302 = vmatprep.subr.mxu0 %v279
    %303 = vmatpush1.msra.mxu0 %v278
    %304 = vmatprep.subr.mxu0 %v281
    %305 = vmatpush1.msra.mxu0 %v280
    %306 = vmatprep.subr.mxu0 0.0
    %307 = vmatpush1.msra.mxu0 0.0
    %308 = vmatprep.subr.mxu0 0.0
    %309 = vmatpush1.msra.mxu0 0.0
    %310 = vmatprep.subr.mxu0 0.0
    %311 = vmatpush1.msra.mxu0 0.0
    %312 = vmatprep.subr.mxu0 0.0
    %313 = vmatpush1.msra.mxu0 0.0
    %314 = vmatprep.subr.mxu0 0.0
    %315 = vmatpush1.msra.mxu0 0.0
    %316 = vmatprep.subr.mxu0 0.0
    %317 = vmatpush1.msra.mxu0 0.0
    %318 = vmatprep.subr.mxu0 0.0
    %319 = vmatpush1.msra.mxu0 0.0
    %320 = vmatprep.subr.mxu0 0.0
    %321 = vmatpush1.msra.mxu0 0.0
    %322 = vmatprep.subr.mxu0 0.0
    %323 = vmatpush1.msra.mxu0 0.0
    %324 = vmatprep.subr.mxu0 0.0
    %325 = vmatpush1.msra.mxu0 0.0
    %326 = vmatprep.subr.mxu0 0.0
    %327 = vmatpush1.msra.mxu0 0.0
    %328 = vmatprep.subr.mxu0 0.0
    %329 = vmatpush1.msra.mxu0 0.0
    %330 = vmatprep.subr.mxu0 0.0
    %331 = vmatpush1.msra.mxu0 0.0
    %332 = vmatprep.subr.mxu0 0.0
    %333 = vmatpush1.msra.mxu0 0.0
    %334 = vmatprep.subr.mxu0 0.0
    %335 = vmatpush1.msra.mxu0 0.0
    %336 = vmatprep.subr.mxu0 0.0
    %337 = vmatpush1.msra.mxu0 0.0
    %338 = vmatprep.subr.mxu0 0.0
    %339 = vmatpush1.msra.mxu0 0.0
    %340 = vmatprep.subr.mxu0 0.0
    %341 = vmatpush1.msra.mxu0 0.0
    %342 = vmatprep.subr.mxu0 0.0
    %343 = vmatpush1.msra.mxu0 0.0
    %344 = vmatprep.subr.mxu0 0.0
    %345 = vmatpush1.msra.mxu0 0.0
    %346 = vmatprep.subr.mxu0 0.0
    %347 = vmatpush1.msra.mxu0 0.0
    %348 = vmatprep.subr.mxu0 0.0
    %349 = vmatpush1.msra.mxu0 0.0
    %350 = vmatprep.subr.mxu0 0.0
    %351 = vmatpush1.msra.mxu0 0.0
    %352 = vmatprep.subr.mxu0 0.0
    %353 = vmatpush1.msra.mxu0 0.0
    %354 = vmatprep.subr.mxu0 0.0
    %355 = vmatpush1.msra.mxu0 0.0
    %356 = vmatprep.subr.mxu0 0.0
    %357 = vmatpush1.msra.mxu0 0.0
    %358 = vmatprep.subr.mxu0 0.0
    %359 = vmatpush1.msra.mxu0 0.0
    %360 = vmatprep.subr.mxu0 0.0
    %361 = vmatpush1.msra.mxu0 0.0
    %362 = vmatprep.mubr.f32.mxu0 0.0
    %363 = vmatmul.mubr.f32.gmra.mrb[0].mxu0 %v296
    %v364 = vpop.f32.mrb[0].mxu0
    %v365 = vadd.f32 %v288, %v364
    %v366 = vpop.f32.mrb[0].mxu0
    %v367 = vadd.f32 %v292, %v366
    %368 = vdwg.mxu0
    %v369 = vtanh.pop %v365
    %v370 = vtanh.pop %v367
    %371 = vst [vmem:[#allocation12] sm:$0xff] %v369
    %372 = vst.msk [vmem:[#allocation12 + $0x8] sm:$0xff] %vm104, %v370
    // Predicated region
    $region46: #{tpu_custom_call.1} parent=1 // pred_check
      _
    $region47: #{tpu_custom_call.1} parent=1 // pred_check_branch
      %374 = sbr.rel (0) target = $region49
    $region48: #{tpu_custom_call.1} parent=1 // pred_region
      %s376 = ssub.s32 256, 256
      %377 = vsyncadd [#allocation5], %s376
      %s379 = sshll.u32 [#allocation12], 4
      %s380 = int_to_ptr.vmem [resolvable:$true] %s379
      %382 = dma.vmem_to_hbm [thread:$0]  %s380, 256, %s6, [#allocation5]
    $region49: #{tpu_custom_call.1} parent=1 // pred_fallthru
      _
    // Predicated region
    $region50: #{tpu_custom_call.1} parent=1 // pred_check
      _
    $region51: #{tpu_custom_call.1} parent=1 // pred_check_branch
      %384 = sbr.rel (0) target = $region53
    $region52: #{tpu_custom_call.1} parent=1 // pred_region
      %385 = dma.done [#allocation5], 256
    $region53: #{tpu_custom_call.1} parent=1 // pred_fallthru
      _
    %386 = vsyncpa [#allocation4], 1
    %387 = vsyncpa [#allocation7], 1
    %388 = vsyncpa [#allocation10], 1
    %389 = vsyncpa [#allocation5], 1

</llo_original>
